<compile_context>
chip_gen: v6e
topology: v6e:2x2x1
jax: 0.10.0
libtpu: 0.0.40
codegen_flags: <defaults>
</compile_context>

<pallas_src>
import jax
import jax.numpy as jnp
from jax.experimental import pallas as pl
from jax.experimental.pallas import tpu as pltpu


# ----------------------------------------------------------------------------- kernel

def span_rep_kernel(idsm_ref, att_ref, b_att_ref, tproj_ref, b_tr_ref, out_ref):
    # idsm_ref : (TB, S, 1) int32   token ids, masked positions encoded as -1
    # att_ref  : (1, V)     f32     embedding @ w_att.T   (folded head_attention weight)
    # b_att_ref: (1, 1)     f32
    # tproj_ref: (V, O)     bf16    embedding @ w_tr      (folded head_transform weight)
    # b_tr_ref : (1, O)     f32
    # out_ref  : (TB, O)    f32
    blk, seq, _ = idsm_ref.shape
    vocab = tproj_ref.shape[0]

    ids = idsm_ref[...]                                   # (TB, S, 1) int32
    valid = ids >= 0                                      # mask folded into the ids
    maskf = valid.astype(jnp.float32)                     # (TB, S, 1)

    # One-hot over the vocab axis (V on lanes); a -1 (masked) id matches nothing -> all-zero row.
    iota_v = jax.lax.broadcasted_iota(jnp.int32, (blk, seq, vocab), 2)
    onehot = (ids == iota_v).astype(jnp.float32)          # (TB, S, V)

    # head_attention folded onto the vocab axis: logits = onehot @ (E @ w_att.T) + b_att
    logits = jnp.sum(onehot * att_ref[...], axis=-1, keepdims=True) + b_att_ref[...]   # (TB, S, 1)

    # Masked softmax over the sequence axis (mask, re-mask, renormalize with +1e-13).
    masked = jnp.where(valid, logits, jnp.float32(-1e30))
    mx = jnp.max(masked, axis=1, keepdims=True)           # (TB, 1, 1)
    e = jnp.exp(masked - mx) * maskf                      # (TB, S, 1)
    denom = jnp.sum(e, axis=1, keepdims=True) + 1e-13     # (TB, 1, 1)
    r = pl.reciprocal(denom, approx=True)                 # EUP seed ...
    r = r * (2.0 - denom * r)                             # ... + one Newton step: f32-exact divide
    weights = e * r                                       # (TB, S, 1); exactly 0 on all-masked rows

    # Pool the one-hot rows by the attention weights, then a single (TB, V)@(V, O) MXU matmul.
    c = jnp.sum(weights * onehot, axis=1)                 # (TB, V)  weighted vocab counts
    sum_w = jnp.sum(weights, axis=1)                      # (TB, 1)  (0 for all-masked rows)
    out = jnp.dot(c.astype(tproj_ref.dtype), tproj_ref[...],
                  preferred_element_type=jnp.float32) + sum_w * b_tr_ref[...]          # (TB, O)
    out_ref[...] = out.astype(out_ref.dtype)


# ----------------------------------------------------------------------------- tiling / planning

def _tpu_plan():
    """Generation-aware budgets: v7x has 64 MiB VMEM and 2 TensorCores; v5e/v6e have 128 MiB, 1 TC."""
    kind = ""
    try:
        kind = jax.devices()[0].device_kind.lower()
    except Exception:
        pass
    if "v7" in kind:
        return {"n_cores": 2, "vmem_limit": 32 << 20, "tile_budget": 16 << 20}
    return {"n_cores": 1, "vmem_limit": 64 << 20, "tile_budget": 32 << 20}


def _step_vmem_bytes(blk, seq, vocab, d_out):
    """Rough per-grid-step VMEM footprint: double-buffered tiles + lane/sublane-padded intermediates."""
    lane, sub = 128, 8
    vpad = ((vocab + lane - 1) // lane) * lane
    opad = ((d_out + lane - 1) // lane) * lane
    spad = ((seq + sub - 1) // sub) * sub
    onehot = 2 * blk * spad * vpad * 4                         # one-hot + its weight-scaled copy (f32)
    temps = 8 * blk * spad * lane * 4                          # (TB, S, 1) softmax temps, lane-padded
    io = 2 * (blk * spad * lane * 4) + 2 * (blk * opad * 4)    # double-buffered ids tile + out tile
    consts = 2 * (vpad * 4 + vpad * opad * 2 + 2 * opad * 4)   # att_vec f32, table_proj bf16, biases
    return onehot + temps + io + consts


def _pick_block_b(batch, seq, vocab, d_out, n_cores, tile_budget):
    """Largest batch block that (a) divides B, (b) fits the VMEM budget, (c) leaves >=2 grid steps
    when the part has 2 TensorCores (v7x); single-core parts take the whole batch when it fits."""
    cands = sorted({batch, *[m for m in range(8, batch, 8) if batch % m == 0]}, reverse=True)
    fitting = [b for b in cands if _step_vmem_bytes(b, seq, vocab, d_out) <= tile_budget]
    if not fitting:
        return cands[-1]      # degenerate shapes: smallest divisor (would really need the HBM-gather path)
    if n_cores >= 2:
        multi = [b for b in fitting if batch // b >= n_cores]
        if multi:
            return multi[0]
    return fitting[0]


# ----------------------------------------------------------------------------- wrapper

@jax.jit
def span_representation(token_ids, mask, params):
    """token_ids: (B, S) int32, mask: (B, S) {0,1}. Returns (B, d_output) f32."""
    batch, seq = token_ids.shape
    table = params["embedding"]
    vocab, _ = table.shape
    d_out = params["w_tr"].shape[1]

    plan = _tpu_plan()
    blk = _pick_block_b(batch, seq, vocab, d_out, plan["n_cores"], plan["tile_budget"])
    assert batch % blk == 0

    # Fold both Linear layers onto the vocab axis (the (B, S, D) embeddings never exist on-chip).
    att_vec = (table @ params["w_att"][0])[None, :]                    # (1, V) f32
    table_proj = (table @ params["w_tr"]).astype(jnp.bfloat16)         # (V, O) bf16 MXU operand

    # Fold the mask into the ids: masked positions become -1 -> all-zero one-hot row in-kernel.
    ids_m = jnp.where(mask != 0, token_ids.astype(jnp.int32), -1).reshape(batch, seq, 1)

    out = pl.pallas_call(
        span_rep_kernel,
        out_shape=jax.ShapeDtypeStruct((batch, d_out), jnp.float32),
        grid_spec=pltpu.PrefetchScalarGridSpec(
            num_scalar_prefetch=0,
            grid=(batch // blk,),
            in_specs=[
                pl.BlockSpec((blk, seq, 1), lambda b: (b, 0, 0)),   # ids (mask folded in)
                pl.BlockSpec((1, vocab), lambda b: (0, 0)),         # folded attention vector
                pl.BlockSpec((1, 1), lambda b: (0, 0)),             # attention bias
                pl.BlockSpec((vocab, d_out), lambda b: (0, 0)),     # projected table (bf16)
                pl.BlockSpec((1, d_out), lambda b: (0, 0)),         # transform bias
            ],
            out_specs=pl.BlockSpec((blk, d_out), lambda b: (b, 0)),
        ),
        compiler_params=pltpu.CompilerParams(
            dimension_semantics=("parallel",),
            vmem_limit_bytes=plan["vmem_limit"],
        ),
    )(ids_m, att_vec, params["b_att"], table_proj, params["b_tr"])
    return out


# ----------------------------------------------------------------------------- reference & params

def span_representation_ref(token_ids, mask, params):
    """Pure-JAX reference with the original (un-reordered, f32, per-token projection) math."""
    emb = jnp.take(params["embedding"], token_ids, axis=0)                       # (B, S, D)
    logits = jnp.einsum("bsd,d->bs", emb, params["w_att"][0]) + params["b_att"][0, 0]
    maskf = mask.astype(jnp.float32)
    masked = jnp.where(maskf > 0, logits, -1e30)
    m = jnp.max(masked, axis=-1, keepdims=True)
    e = jnp.exp(masked - m) * maskf
    weights = e / (jnp.sum(e, axis=-1, keepdims=True) + 1e-13)                   # (B, S)
    trans = emb @ params["w_tr"] + params["b_tr"]                                # (B, S, O)
    return jnp.sum(weights[..., None] * trans, axis=1)                           # (B, O)


def _xavier_normal(key, shape):
    fan_in, fan_out = shape
    std = (2.0 / (fan_in + fan_out)) ** 0.5
    return (jax.random.normal(key, shape) * std).astype(jnp.float32)


def make_params(vocab_size, d_embed, d_output, key):
    k_emb, k_att, k_tr = jax.random.split(key, 3)
    # PyTorch Linear is x @ W.T + b; w_att keeps the PyTorch (1, D) layout, w_tr is stored as W.T (D, O).
    return {
        "embedding": _xavier_normal(k_emb, (vocab_size, d_embed)),
        "w_att": _xavier_normal(k_att, (1, d_embed)),
        "b_att": jnp.zeros((1, 1), jnp.float32),
        "w_tr": _xavier_normal(k_tr, (d_embed, d_output)),
        "b_tr": jnp.zeros((1, d_output), jnp.float32),
    }


if __name__ == "__main__":
    # Config consistent with the module: n_lstm_layers = 0, d_lstm_hidden = 16 => feature dim = 32.
    vocab_size = 50
    d_embed = 32          # == 2 * d_lstm_hidden
    d_output = 16
    batch, seq = 16, 8    # v7x: 2 blocks of 8 rows (one per TC); v5e/v6e: single block of 16

    key = jax.random.PRNGKey(0)
    k_params, k_tok = jax.random.split(key)
    params = make_params(vocab_size, d_embed, d_output, k_params)

    token_ids = jax.random.randint(k_tok, (batch, seq), 0, vocab_size, dtype=jnp.int32)
    lengths = jnp.array([8, 5, 3, 8, 1, 6, 0, 7, 4, 8, 2, 5, 7, 3, 6, 8], dtype=jnp.int32)
    mask = (jnp.arange(seq)[None, :] < lengths[:, None]).astype(jnp.int32)       # (B, S), one all-masked row

    rep = span_representation(token_ids, mask, params)
    jax.block_until_ready(rep)
    assert rep.shape == (batch, d_output)

    ref = span_representation_ref(token_ids, mask, params)
    err = float(jnp.max(jnp.abs(rep - ref)))
    # Softmax is f32-exact (Newton-refined reciprocal); the remaining gap is the intentional bf16
    # rounding of the MXU operands (table_proj / pooled counts), a few 1e-3 absolute at these scales.
    assert err < 1e-2, f"max abs error vs reference: {err}"
    print("KERNEL_OK")
</pallas_src>

<mosaic_0001>
module attributes {stable_mosaic.version = 11 : i64} {
  func.func @span_rep_kernel(%arg0: i32, %arg1: memref<16x8x1xi32, #tpu.memory_space<vmem>>, %arg2: memref<1x50xf32, #tpu.memory_space<vmem>>, %arg3: memref<1x1xf32, #tpu.memory_space<vmem>>, %arg4: memref<50x16xbf16, #tpu.memory_space<vmem>>, %arg5: memref<1x16xf32, #tpu.memory_space<vmem>>, %arg6: memref<16x16xf32, #tpu.memory_space<vmem>>) attributes {dimension_semantics = [#tpu.dimension_semantics<parallel>], iteration_bounds = array<i64: 1>, scalar_prefetch = 0 : i64, scratch_operands = 0 : i64, tpu.core_type = #tpu.core_type<tc>, window_params = [{transform_indices = @transform_0, window_bounds = array<i64: 16, 8, 1>}, {pipeline_mode = #tpu.pipeline_mode<synchronous>, transform_indices = @transform_1, window_bounds = array<i64: 1, 50>}, {pipeline_mode = #tpu.pipeline_mode<synchronous>, transform_indices = @transform_2, window_bounds = array<i64: 1, 1>}, {pipeline_mode = #tpu.pipeline_mode<synchronous>, transform_indices = @transform_3, window_bounds = array<i64: 50, 16>}, {pipeline_mode = #tpu.pipeline_mode<synchronous>, transform_indices = @transform_4, window_bounds = array<i64: 1, 16>}, {transform_indices = @transform_5, window_bounds = array<i64: 16, 16>}]} {
    %c0 = arith.constant 0 : index
    %c0_0 = arith.constant 0 : index
    %c0_1 = arith.constant 0 : index
    %0 = vector.load %arg1[%c0, %c0_0, %c0_1] : memref<16x8x1xi32, #tpu.memory_space<vmem>>, vector<16x8x1xi32>
    %c0_i32 = arith.constant 0 : i32
    %1 = vector.broadcast %c0_i32 : i32 to vector<16x8x1xi32>
    %2 = arith.cmpi sge, %0, %1 : vector<16x8x1xi32>
    %3 = arith.extui %2 : vector<16x8x1xi1> to vector<16x8x1xi32>
    %4 = arith.sitofp %3 : vector<16x8x1xi32> to vector<16x8x1xf32>
    %5 = tpu.iota {dimensions = array<i32: 2>} : vector<16x8x50xi32>
    %6 = vector.broadcast %0 : vector<16x8x1xi32> to vector<16x8x50xi32>
    %7 = arith.cmpi eq, %6, %5 : vector<16x8x50xi32>
    %8 = arith.extui %7 : vector<16x8x50xi1> to vector<16x8x50xi32>
    %9 = arith.sitofp %8 : vector<16x8x50xi32> to vector<16x8x50xf32>
    %c0_2 = arith.constant 0 : index
    %c0_3 = arith.constant 0 : index
    %10 = vector.load %arg2[%c0_2, %c0_3] : memref<1x50xf32, #tpu.memory_space<vmem>>, vector<1x50xf32>
    %11 = vector.shape_cast %10 : vector<1x50xf32> to vector<1x1x50xf32>
    %12 = vector.broadcast %11 : vector<1x1x50xf32> to vector<16x8x50xf32>
    %13 = arith.mulf %9, %12 : vector<16x8x50xf32>
    %cst = arith.constant dense<0.000000e+00> : vector<16x8xf32>
    %14 = vector.multi_reduction <add>, %13, %cst [2] : vector<16x8x50xf32> to vector<16x8xf32>
    %15 = vector.shape_cast %14 : vector<16x8xf32> to vector<16x8x1xf32>
    %c0_4 = arith.constant 0 : index
    %c0_5 = arith.constant 0 : index
    %16 = vector.load %arg3[%c0_4, %c0_5] : memref<1x1xf32, #tpu.memory_space<vmem>>, vector<1x1xf32>
    %17 = vector.shape_cast %16 : vector<1x1xf32> to vector<1x1x1xf32>
    %18 = vector.broadcast %17 : vector<1x1x1xf32> to vector<16x8x1xf32>
    %19 = arith.addf %15, %18 : vector<16x8x1xf32>
    %cst_6 = arith.constant -1.000000e+30 : f32
    %20 = vector.broadcast %cst_6 : f32 to vector<16x8x1xf32>
    %21 = arith.select %2, %19, %20 : vector<16x8x1xi1>, vector<16x8x1xf32>
    %cst_7 = arith.constant dense<0xFF800000> : vector<16x1xf32>
    %22 = vector.multi_reduction <maximumf>, %21, %cst_7 [1] : vector<16x8x1xf32> to vector<16x1xf32>
    %23 = vector.shape_cast %22 : vector<16x1xf32> to vector<16x1x1xf32>
    %24 = vector.broadcast %23 : vector<16x1x1xf32> to vector<16x8x1xf32>
    %25 = arith.subf %21, %24 : vector<16x8x1xf32>
    %26 = math.exp %25 : vector<16x8x1xf32>
    %27 = arith.mulf %26, %4 : vector<16x8x1xf32>
    %cst_8 = arith.constant dense<0.000000e+00> : vector<16x1xf32>
    %28 = vector.multi_reduction <add>, %27, %cst_8 [1] : vector<16x8x1xf32> to vector<16x1xf32>
    %29 = vector.shape_cast %28 : vector<16x1xf32> to vector<16x1x1xf32>
    %cst_9 = arith.constant 9.99999982E-14 : f32
    %30 = vector.broadcast %cst_9 : f32 to vector<16x1x1xf32>
    %31 = arith.addf %29, %30 : vector<16x1x1xf32>
    %32 = tpu.reciprocal %31 {approx = true} : vector<16x1x1xf32> -> vector<16x1x1xf32>
    %33 = arith.mulf %31, %32 : vector<16x1x1xf32>
    %cst_10 = arith.constant 2.000000e+00 : f32
    %34 = vector.broadcast %cst_10 : f32 to vector<16x1x1xf32>
    %35 = arith.subf %34, %33 : vector<16x1x1xf32>
    %36 = arith.mulf %32, %35 : vector<16x1x1xf32>
    %37 = vector.broadcast %36 : vector<16x1x1xf32> to vector<16x8x1xf32>
    %38 = arith.mulf %27, %37 : vector<16x8x1xf32>
    %39 = vector.broadcast %38 : vector<16x8x1xf32> to vector<16x8x50xf32>
    %40 = arith.mulf %39, %9 : vector<16x8x50xf32>
    %cst_11 = arith.constant dense<0.000000e+00> : vector<16x50xf32>
    %41 = vector.multi_reduction <add>, %40, %cst_11 [1] : vector<16x8x50xf32> to vector<16x50xf32>
    %cst_12 = arith.constant dense<0.000000e+00> : vector<16x1xf32>
    %42 = vector.multi_reduction <add>, %38, %cst_12 [1] : vector<16x8x1xf32> to vector<16x1xf32>
    %43 = arith.truncf %41 : vector<16x50xf32> to vector<16x50xbf16>
    %c0_13 = arith.constant 0 : index
    %c0_14 = arith.constant 0 : index
    %44 = vector.load %arg4[%c0_13, %c0_14] : memref<50x16xbf16, #tpu.memory_space<vmem>>, vector<50x16xbf16>
    %cst_15 = arith.constant dense<0.000000e+00> : vector<16x16xf32>
    %45 = tpu.matmul %43, %44, %cst_15 {dimension_numbers = #tpu.dot_dimension_numbers<[1], [0], [0], [1], [0, 0, 1, 1], [], []>} : vector<16x50xbf16>, vector<50x16xbf16>, vector<16x16xf32> -> vector<16x16xf32>
    %c0_16 = arith.constant 0 : index
    %c0_17 = arith.constant 0 : index
    %46 = vector.load %arg5[%c0_16, %c0_17] : memref<1x16xf32, #tpu.memory_space<vmem>>, vector<1x16xf32>
    %47 = vector.broadcast %42 : vector<16x1xf32> to vector<16x16xf32>
    %48 = vector.broadcast %46 : vector<1x16xf32> to vector<16x16xf32>
    %49 = arith.mulf %47, %48 : vector<16x16xf32>
    %50 = arith.addf %45, %49 : vector<16x16xf32>
    %c0_18 = arith.constant 0 : index
    %c0_19 = arith.constant 0 : index
    %51 = vector.load %arg6[%c0_18, %c0_19] : memref<16x16xf32, #tpu.memory_space<vmem>>, vector<16x16xf32>
    tpu.vector_store %arg6[%c0_18, %c0_19], %50 {strides = array<i32>} : memref<16x16xf32, #tpu.memory_space<vmem>>, vector<16x16xf32>,
    return
  }
  func.func @transform_0(%arg0: i32) -> (i32, i32, i32) {
    %c0_i32 = arith.constant 0 : i32
    %c0_i32_0 = arith.constant 0 : i32
    %c0_i32_1 = arith.constant 0 : i32
    return %arg0, %c0_i32, %c0_i32_0 : i32, i32, i32
  }
  func.func @transform_1(%arg0: i32) -> (i32, i32) {
    %c0_i32 = arith.constant 0 : i32
    %c0_i32_0 = arith.constant 0 : i32
    %c0_i32_1 = arith.constant 0 : i32
    return %c0_i32, %c0_i32_0 : i32, i32
  }
  func.func @transform_2(%arg0: i32) -> (i32, i32) {
    %c0_i32 = arith.constant 0 : i32
    %c0_i32_0 = arith.constant 0 : i32
    %c0_i32_1 = arith.constant 0 : i32
    return %c0_i32, %c0_i32_0 : i32, i32
  }
  func.func @transform_3(%arg0: i32) -> (i32, i32) {
    %c0_i32 = arith.constant 0 : i32
    %c0_i32_0 = arith.constant 0 : i32
    %c0_i32_1 = arith.constant 0 : i32
    return %c0_i32, %c0_i32_0 : i32, i32
  }
  func.func @transform_4(%arg0: i32) -> (i32, i32) {
    %c0_i32 = arith.constant 0 : i32
    %c0_i32_0 = arith.constant 0 : i32
    %c0_i32_1 = arith.constant 0 : i32
    return %c0_i32, %c0_i32_0 : i32, i32
  }
  func.func @transform_5(%arg0: i32) -> (i32, i32) {
    %c0_i32 = arith.constant 0 : i32
    %c0_i32_0 = arith.constant 0 : i32
    return %arg0, %c0_i32 : i32, i32
  }
}

</mosaic_0001>

<llo_original>
// kernel: span_representation.1
$region0: #{span_representation.1}
  #allocation0 [shape = 'u32[]', space=smem, size = 0x4, offset = 0x4, fixed_abs, tag = 'smem constant byte address 0x4 - core index']
  #allocation1 [shape = 'u32[144,128]{1,0:T(1,128)}', space=vmem, size = 0x12000, scoped, tag = 'internal scratch']
  #allocation2 [shape = 'f32[1,1]{1,0:T(1,128)S(1)}', space=vmem, size = 0x200, scoped, tag = 'scoped memory for span_representation.1']
  %s0 = inlined_call_operand.vmem [shape: s32[16,8,1], index: 0, kind: input, shape index: {}]
  %s1 = inlined_call_operand.vmem [shape: f32[1,50], index: 1, kind: input, shape index: {}]
  %s2 = inlined_call_operand.<no memory space> [shape: f32[1,1], index: 2, kind: input, shape index: {}]
  %s3 = inlined_call_operand.vmem [shape: bf16[50,16], index: 3, kind: input, shape index: {}]
  %s4 = inlined_call_operand.vmem [shape: f32[1,16], index: 4, kind: input, shape index: {}]
  %s5 = inlined_call_operand.hbm [shape: f32[16,16], index: 5, kind: output, shape index: {}]
  %s6 = sld [smem:[#allocation0]]
  $region30: #{span_representation.1} parent=0
    _
  %s8 = ssub.s32 1, %s6
  %s9 = scalar_select 0, %s8, %s6
  %v10 = vstv %s2
  %11 = vst [vmem:[#allocation2] sm:$0x1] %v10
  $region1: #{span_representation.1} parent=0
    #allocation3 [shape = 'u8[8192]{0}', space=vmem, size = 0x2000, scoped, tag = 'output window, operand 0, single buffered']
    #allocation4 [shape = 's32[1]{0}', space=sflag, size = 0x4, scoped, tag = 'scoped memory for span_representation.1']
    %12 = vsyncpa [#allocation4], 0
    // Predicated region
    $region2: #{span_representation.1} parent=1 // pred_check
      _
    $region3: #{span_representation.1} parent=1 // pred_check_branch
      %14 = sbr.rel (0) target = $region5
    $region4: #{span_representation.1} parent=1 // pred_region
      _
    $region5: #{span_representation.1} parent=1 // pred_fallthru
      _
    // Predicated region
    $region6: #{span_representation.1} parent=1 // pred_check
      _
    $region7: #{span_representation.1} parent=1 // pred_check_branch
      %16 = sbr.rel (0) target = $region9
    $region8: #{span_representation.1} parent=1 // pred_region
      _
    $region9: #{span_representation.1} parent=1 // pred_fallthru
      _
    // Predicated region
    $region10: #{span_representation.1} parent=1 // pred_check
      _
    $region11: #{span_representation.1} parent=1 // pred_check_branch
      %18 = sbr.rel (0) target = $region13
    $region12: #{span_representation.1} parent=1 // pred_region
      _
    $region13: #{span_representation.1} parent=1 // pred_fallthru
      _
    // Predicated region
    $region14: #{span_representation.1} parent=1 // pred_check
      _
    $region15: #{span_representation.1} parent=1 // pred_check_branch
      %20 = sbr.rel (0) target = $region17
    $region16: #{span_representation.1} parent=1 // pred_region
      _
    $region17: #{span_representation.1} parent=1 // pred_fallthru
      _
    // Predicated region
    $region18: #{span_representation.1} parent=1 // pred_check
      _
    $region19: #{span_representation.1} parent=1 // pred_check_branch
      %22 = sbr.rel (0) target = $region21
    $region20: #{span_representation.1} parent=1 // pred_region
      _
    $region21: #{span_representation.1} parent=1 // pred_fallthru
      _
    %v24 = vld [vmem:[%s0] sm:$0xff]
    %v25 = vld [vmem:[%s0 + $0x8] sm:$0xff]
    %v26 = vld [vmem:[%s0 + $0x10] sm:$0xff]
    %v27 = vld [vmem:[%s0 + $0x18] sm:$0xff]
    %v28 = vld [vmem:[%s0 + $0x20] sm:$0xff]
    %v29 = vld [vmem:[%s0 + $0x28] sm:$0xff]
    %v30 = vld [vmem:[%s0 + $0x30] sm:$0xff]
    %v31 = vld [vmem:[%s0 + $0x38] sm:$0xff]
    %v32 = vld [vmem:[%s0 + $0x40] sm:$0xff]
    %v33 = vld [vmem:[%s0 + $0x48] sm:$0xff]
    %v34 = vld [vmem:[%s0 + $0x50] sm:$0xff]
    %v35 = vld [vmem:[%s0 + $0x58] sm:$0xff]
    %v36 = vld [vmem:[%s0 + $0x60] sm:$0xff]
    %v37 = vld [vmem:[%s0 + $0x68] sm:$0xff]
    %v38 = vld [vmem:[%s0 + $0x70] sm:$0xff]
    %v39 = vld [vmem:[%s0 + $0x78] sm:$0xff]
    %vm40 = vcmp.ge.s32.totalorder %v24, 0
    %vm41 = vcmp.ge.s32.totalorder %v25, 0
    %vm42 = vcmp.ge.s32.totalorder %v26, 0
    %vm43 = vcmp.ge.s32.totalorder %v27, 0
    %vm44 = vcmp.ge.s32.totalorder %v28, 0
    %vm45 = vcmp.ge.s32.totalorder %v29, 0
    %vm46 = vcmp.ge.s32.totalorder %v30, 0
    %vm47 = vcmp.ge.s32.totalorder %v31, 0
    %vm48 = vcmp.ge.s32.totalorder %v32, 0
    %vm49 = vcmp.ge.s32.totalorder %v33, 0
    %vm50 = vcmp.ge.s32.totalorder %v34, 0
    %vm51 = vcmp.ge.s32.totalorder %v35, 0
    %vm52 = vcmp.ge.s32.totalorder %v36, 0
    %vm53 = vcmp.ge.s32.totalorder %v37, 0
    %vm54 = vcmp.ge.s32.totalorder %v38, 0
    %vm55 = vcmp.ge.s32.totalorder %v39, 0
    %v56 = vsel %vm40, 1, 0
    %v57 = vsel %vm41, 1, 0
    %v58 = vsel %vm42, 1, 0
    %v59 = vsel %vm43, 1, 0
    %v60 = vsel %vm44, 1, 0
    %v61 = vsel %vm45, 1, 0
    %v62 = vsel %vm46, 1, 0
    %v63 = vsel %vm47, 1, 0
    %v64 = vsel %vm48, 1, 0
    %v65 = vsel %vm49, 1, 0
    %v66 = vsel %vm50, 1, 0
    %v67 = vsel %vm51, 1, 0
    %v68 = vsel %vm52, 1, 0
    %v69 = vsel %vm53, 1, 0
    %v70 = vsel %vm54, 1, 0
    %v71 = vsel %vm55, 1, 0
    %v72 = vcvt.s32.f32 %v56
    %v73 = vcvt.s32.f32 %v57
    %v74 = vcvt.s32.f32 %v58
    %v75 = vcvt.s32.f32 %v59
    %v76 = vcvt.s32.f32 %v60
    %v77 = vcvt.s32.f32 %v61
    %v78 = vcvt.s32.f32 %v62
    %v79 = vcvt.s32.f32 %v63
    %v80 = vcvt.s32.f32 %v64
    %v81 = vcvt.s32.f32 %v65
    %v82 = vcvt.s32.f32 %v66
    %v83 = vcvt.s32.f32 %v67
    %v84 = vcvt.s32.f32 %v68
    %v85 = vcvt.s32.f32 %v69
    %v86 = vcvt.s32.f32 %v70
    %v87 = vcvt.s32.f32 %v71
    %v88 = vlaneseq
    %v89 = vand.u32 %v88, 127
    %90 = vset.pattern.permute.xlu0 0
    %91 = vperm.xlu0 %90, %v24
    %v92 = vpop.permute.xlu0 %91
    %93 = vset.pattern.permute.xlu0 0
    %94 = vperm.xlu0 %93, %v25
    %v95 = vpop.permute.xlu0 %94
    %96 = vset.pattern.permute.xlu0 0
    %97 = vperm.xlu0 %96, %v26
    %v98 = vpop.permute.xlu0 %97
    %99 = vset.pattern.permute.xlu0 0
    %100 = vperm.xlu0 %99, %v27
    %v101 = vpop.permute.xlu0 %100
    %102 = vset.pattern.permute.xlu0 0
    %103 = vperm.xlu0 %102, %v28
    %v104 = vpop.permute.xlu0 %103
    %105 = vset.pattern.permute.xlu0 0
    %106 = vperm.xlu0 %105, %v29
    %v107 = vpop.permute.xlu0 %106
    %108 = vset.pattern.permute.xlu0 0
    %109 = vperm.xlu0 %108, %v30
    %v110 = vpop.permute.xlu0 %109
    %111 = vset.pattern.permute.xlu0 0
    %112 = vperm.xlu0 %111, %v31
    %v113 = vpop.permute.xlu0 %112
    %114 = vset.pattern.permute.xlu0 0
    %115 = vperm.xlu0 %114, %v32
    %v116 = vpop.permute.xlu0 %115
    %117 = vset.pattern.permute.xlu0 0
    %118 = vperm.xlu0 %117, %v33
    %v119 = vpop.permute.xlu0 %118
    %120 = vset.pattern.permute.xlu0 0
    %121 = vperm.xlu0 %120, %v34
    %v122 = vpop.permute.xlu0 %121
    %123 = vset.pattern.permute.xlu0 0
    %124 = vperm.xlu0 %123, %v35
    %v125 = vpop.permute.xlu0 %124
    %126 = vset.pattern.permute.xlu0 0
    %127 = vperm.xlu0 %126, %v36
    %v128 = vpop.permute.xlu0 %127
    %129 = vset.pattern.permute.xlu0 0
    %130 = vperm.xlu0 %129, %v37
    %v131 = vpop.permute.xlu0 %130
    %132 = vset.pattern.permute.xlu0 0
    %133 = vperm.xlu0 %132, %v38
    %v134 = vpop.permute.xlu0 %133
    %135 = vset.pattern.permute.xlu0 0
    %136 = vperm.xlu0 %135, %v39
    %v137 = vpop.permute.xlu0 %136
    %vm138 = vcmp.eq.s32.totalorder %v92, %v89
    %vm139 = vcmp.eq.s32.totalorder %v95, %v89
    %vm140 = vcmp.eq.s32.totalorder %v98, %v89
    %vm141 = vcmp.eq.s32.totalorder %v101, %v89
    %vm142 = vcmp.eq.s32.totalorder %v104, %v89
    %vm143 = vcmp.eq.s32.totalorder %v107, %v89
    %vm144 = vcmp.eq.s32.totalorder %v110, %v89
    %vm145 = vcmp.eq.s32.totalorder %v113, %v89
    %vm146 = vcmp.eq.s32.totalorder %v116, %v89
    %vm147 = vcmp.eq.s32.totalorder %v119, %v89
    %vm148 = vcmp.eq.s32.totalorder %v122, %v89
    %vm149 = vcmp.eq.s32.totalorder %v125, %v89
    %vm150 = vcmp.eq.s32.totalorder %v128, %v89
    %vm151 = vcmp.eq.s32.totalorder %v131, %v89
    %vm152 = vcmp.eq.s32.totalorder %v134, %v89
    %vm153 = vcmp.eq.s32.totalorder %v137, %v89
    %v154 = vsel %vm138, 1, 0
    %v155 = vsel %vm139, 1, 0
    %v156 = vsel %vm140, 1, 0
    %v157 = vsel %vm141, 1, 0
    %v158 = vsel %vm142, 1, 0
    %v159 = vsel %vm143, 1, 0
    %v160 = vsel %vm144, 1, 0
    %v161 = vsel %vm145, 1, 0
    %v162 = vsel %vm146, 1, 0
    %v163 = vsel %vm147, 1, 0
    %v164 = vsel %vm148, 1, 0
    %v165 = vsel %vm149, 1, 0
    %v166 = vsel %vm150, 1, 0
    %v167 = vsel %vm151, 1, 0
    %v168 = vsel %vm152, 1, 0
    %v169 = vsel %vm153, 1, 0
    %v170 = vcvt.s32.f32 %v154
    %v171 = vcvt.s32.f32 %v155
    %v172 = vcvt.s32.f32 %v156
    %v173 = vcvt.s32.f32 %v157
    %v174 = vcvt.s32.f32 %v158
    %v175 = vcvt.s32.f32 %v159
    %v176 = vcvt.s32.f32 %v160
    %v177 = vcvt.s32.f32 %v161
    %v178 = vcvt.s32.f32 %v162
    %v179 = vcvt.s32.f32 %v163
    %v180 = vcvt.s32.f32 %v164
    %v181 = vcvt.s32.f32 %v165
    %v182 = vcvt.s32.f32 %v166
    %v183 = vcvt.s32.f32 %v167
    %v184 = vcvt.s32.f32 %v168
    %v185 = vcvt.s32.f32 %v169
    %v186 = vld [vmem:[%s1] sm:$0x1]
    %v188 = vlaneseq
    %v189 = vshrl.u32 %v188, 7
    %v190 = vsub.s32 0, %v189
    %v191 = vrot.slane %v186, %v190
    %v193 = vmul.f32 %v170, %v191
    %v194 = vmul.f32 %v171, %v191
    %v195 = vmul.f32 %v172, %v191
    %v196 = vmul.f32 %v173, %v191
    %v197 = vmul.f32 %v174, %v191
    %v198 = vmul.f32 %v175, %v191
    %v199 = vmul.f32 %v176, %v191
    %v200 = vmul.f32 %v177, %v191
    %v201 = vmul.f32 %v178, %v191
    %v202 = vmul.f32 %v179, %v191
    %v203 = vmul.f32 %v180, %v191
    %v204 = vmul.f32 %v181, %v191
    %v205 = vmul.f32 %v182, %v191
    %v206 = vmul.f32 %v183, %v191
    %v207 = vmul.f32 %v184, %v191
    %v208 = vmul.f32 %v185, %v191
    %vm209 = vcmask 408576
    %v210 = vsel %vm209, %v193, 0.0
    %211 = vadd.xlane.f32.xlu0 %v210
    %v212 = vpop.xlane.xlu0 %211
    %v213 = vsel %vm209, %v194, 0.0
    %214 = vadd.xlane.f32.xlu0 %v213
    %v215 = vpop.xlane.xlu0 %214
    %v216 = vsel %vm209, %v195, 0.0
    %217 = vadd.xlane.f32.xlu0 %v216
    %v218 = vpop.xlane.xlu0 %217
    %v219 = vsel %vm209, %v196, 0.0
    %220 = vadd.xlane.f32.xlu0 %v219
    %v221 = vpop.xlane.xlu0 %220
    %v222 = vsel %vm209, %v197, 0.0
    %223 = vadd.xlane.f32.xlu0 %v222
    %v224 = vpop.xlane.xlu0 %223
    %v225 = vsel %vm209, %v198, 0.0
    %226 = vadd.xlane.f32.xlu0 %v225
    %v227 = vpop.xlane.xlu0 %226
    %v228 = vsel %vm209, %v199, 0.0
    %229 = vadd.xlane.f32.xlu0 %v228
    %v230 = vpop.xlane.xlu0 %229
    %v231 = vsel %vm209, %v200, 0.0
    %232 = vadd.xlane.f32.xlu0 %v231
    %v233 = vpop.xlane.xlu0 %232
    %v234 = vsel %vm209, %v201, 0.0
    %235 = vadd.xlane.f32.xlu0 %v234
    %v236 = vpop.xlane.xlu0 %235
    %v237 = vsel %vm209, %v202, 0.0
    %238 = vadd.xlane.f32.xlu0 %v237
    %v239 = vpop.xlane.xlu0 %238
    %v240 = vsel %vm209, %v203, 0.0
    %241 = vadd.xlane.f32.xlu0 %v240
    %v242 = vpop.xlane.xlu0 %241
    %v243 = vsel %vm209, %v204, 0.0
    %244 = vadd.xlane.f32.xlu0 %v243
    %v245 = vpop.xlane.xlu0 %244
    %v246 = vsel %vm209, %v205, 0.0
    %247 = vadd.xlane.f32.xlu0 %v246
    %v248 = vpop.xlane.xlu0 %247
    %v249 = vsel %vm209, %v206, 0.0
    %250 = vadd.xlane.f32.xlu0 %v249
    %v251 = vpop.xlane.xlu0 %250
    %v252 = vsel %vm209, %v207, 0.0
    %253 = vadd.xlane.f32.xlu0 %v252
    %v254 = vpop.xlane.xlu0 %253
    %v255 = vsel %vm209, %v208, 0.0
    %256 = vadd.xlane.f32.xlu0 %v255
    %v257 = vpop.xlane.xlu0 %256
    %v258 = vld [vmem:[#allocation2] sm:$0x1]
    %v260 = vlaneseq
    %v261 = vshrl.u32 %v260, 7
    %v262 = vsub.s32 0, %v261
    %v263 = vrot.slane %v258, %v262
    %v265 = vadd.f32 %v212, %v263
    %v266 = vadd.f32 %v215, %v263
    %v267 = vadd.f32 %v218, %v263
    %v268 = vadd.f32 %v221, %v263
    %v269 = vadd.f32 %v224, %v263
    %v270 = vadd.f32 %v227, %v263
    %v271 = vadd.f32 %v230, %v263
    %v272 = vadd.f32 %v233, %v263
    %v273 = vadd.f32 %v236, %v263
    %v274 = vadd.f32 %v239, %v263
    %v275 = vadd.f32 %v242, %v263
    %v276 = vadd.f32 %v245, %v263
    %v277 = vadd.f32 %v248, %v263
    %v278 = vadd.f32 %v251, %v263
    %v279 = vadd.f32 %v254, %v263
    %v280 = vadd.f32 %v257, %v263
    %v281 = vsel %vm40, %v265, -1e+30
    %v282 = vsel %vm41, %v266, -1e+30
    %v283 = vsel %vm42, %v267, -1e+30
    %v284 = vsel %vm43, %v268, -1e+30
    %v285 = vsel %vm44, %v269, -1e+30
    %v286 = vsel %vm45, %v270, -1e+30
    %v287 = vsel %vm46, %v271, -1e+30
    %v288 = vsel %vm47, %v272, -1e+30
    %v289 = vsel %vm48, %v273, -1e+30
    %v290 = vsel %vm49, %v274, -1e+30
    %v291 = vsel %vm50, %v275, -1e+30
    %v292 = vsel %vm51, %v276, -1e+30
    %v293 = vsel %vm52, %v277, -1e+30
    %v294 = vsel %vm53, %v278, -1e+30
    %v295 = vsel %vm54, %v279, -1e+30
    %v296 = vsel %vm55, %v280, -1e+30
    %vm297 = vcmask 7168
    %v298 = vsel %vm297, %v281, -inf
    %v299 = vrot.slane %v298, 4
    %v300 = vmax.f32 %v298, %v299
    %v301 = vrot.slane %v300, 2
    %v302 = vmax.f32 %v300, %v301
    %v303 = vrot.slane %v302, 1
    %v304 = vmax.f32 %v302, %v303
    %v305 = vsel %vm297, %v282, -inf
    %v306 = vrot.slane %v305, 4
    %v307 = vmax.f32 %v305, %v306
    %v308 = vrot.slane %v307, 2
    %v309 = vmax.f32 %v307, %v308
    %v310 = vrot.slane %v309, 1
    %v311 = vmax.f32 %v309, %v310
    %v312 = vsel %vm297, %v283, -inf
    %v313 = vrot.slane %v312, 4
    %v314 = vmax.f32 %v312, %v313
    %v315 = vrot.slane %v314, 2
    %v316 = vmax.f32 %v314, %v315
    %v317 = vrot.slane %v316, 1
    %v318 = vmax.f32 %v316, %v317
    %v319 = vsel %vm297, %v284, -inf
    %v320 = vrot.slane %v319, 4
    %v321 = vmax.f32 %v319, %v320
    %v322 = vrot.slane %v321, 2
    %v323 = vmax.f32 %v321, %v322
    %v324 = vrot.slane %v323, 1
    %v325 = vmax.f32 %v323, %v324
    %v326 = vsel %vm297, %v285, -inf
    %v327 = vrot.slane %v326, 4
    %v328 = vmax.f32 %v326, %v327
    %v329 = vrot.slane %v328, 2
    %v330 = vmax.f32 %v328, %v329
    %v331 = vrot.slane %v330, 1
    %v332 = vmax.f32 %v330, %v331
    %v333 = vsel %vm297, %v286, -inf
    %v334 = vrot.slane %v333, 4
    %v335 = vmax.f32 %v333, %v334
    %v336 = vrot.slane %v335, 2
    %v337 = vmax.f32 %v335, %v336
    %v338 = vrot.slane %v337, 1
    %v339 = vmax.f32 %v337, %v338
    %v340 = vsel %vm297, %v287, -inf
    %v341 = vrot.slane %v340, 4
    %v342 = vmax.f32 %v340, %v341
    %v343 = vrot.slane %v342, 2
    %v344 = vmax.f32 %v342, %v343
    %v345 = vrot.slane %v344, 1
    %v346 = vmax.f32 %v344, %v345
    %v347 = vsel %vm297, %v288, -inf
    %v348 = vrot.slane %v347, 4
    %v349 = vmax.f32 %v347, %v348
    %v350 = vrot.slane %v349, 2
    %v351 = vmax.f32 %v349, %v350
    %v352 = vrot.slane %v351, 1
    %v353 = vmax.f32 %v351, %v352
    %v354 = vsel %vm297, %v289, -inf
    %v355 = vrot.slane %v354, 4
    %v356 = vmax.f32 %v354, %v355
    %v357 = vrot.slane %v356, 2
    %v358 = vmax.f32 %v356, %v357
    %v359 = vrot.slane %v358, 1
    %v360 = vmax.f32 %v358, %v359
    %v361 = vsel %vm297, %v290, -inf
    %v362 = vrot.slane %v361, 4
    %v363 = vmax.f32 %v361, %v362
    %v364 = vrot.slane %v363, 2
    %v365 = vmax.f32 %v363, %v364
    %v366 = vrot.slane %v365, 1
    %v367 = vmax.f32 %v365, %v366
    %v368 = vsel %vm297, %v291, -inf
    %v369 = vrot.slane %v368, 4
    %v370 = vmax.f32 %v368, %v369
    %v371 = vrot.slane %v370, 2
    %v372 = vmax.f32 %v370, %v371
    %v373 = vrot.slane %v372, 1
    %v374 = vmax.f32 %v372, %v373
    %v375 = vsel %vm297, %v292, -inf
    %v376 = vrot.slane %v375, 4
    %v377 = vmax.f32 %v375, %v376
    %v378 = vrot.slane %v377, 2
    %v379 = vmax.f32 %v377, %v378
    %v380 = vrot.slane %v379, 1
    %v381 = vmax.f32 %v379, %v380
    %v382 = vsel %vm297, %v293, -inf
    %v383 = vrot.slane %v382, 4
    %v384 = vmax.f32 %v382, %v383
    %v385 = vrot.slane %v384, 2
    %v386 = vmax.f32 %v384, %v385
    %v387 = vrot.slane %v386, 1
    %v388 = vmax.f32 %v386, %v387
    %v389 = vsel %vm297, %v294, -inf
    %v390 = vrot.slane %v389, 4
    %v391 = vmax.f32 %v389, %v390
    %v392 = vrot.slane %v391, 2
    %v393 = vmax.f32 %v391, %v392
    %v394 = vrot.slane %v393, 1
    %v395 = vmax.f32 %v393, %v394
    %v396 = vsel %vm297, %v295, -inf
    %v397 = vrot.slane %v396, 4
    %v398 = vmax.f32 %v396, %v397
    %v399 = vrot.slane %v398, 2
    %v400 = vmax.f32 %v398, %v399
    %v401 = vrot.slane %v400, 1
    %v402 = vmax.f32 %v400, %v401
    %v403 = vsel %vm297, %v296, -inf
    %v404 = vrot.slane %v403, 4
    %v405 = vmax.f32 %v403, %v404
    %v406 = vrot.slane %v405, 2
    %v407 = vmax.f32 %v405, %v406
    %v408 = vrot.slane %v407, 1
    %v409 = vmax.f32 %v407, %v408
    %v410 = vsub.f32 %v281, %v304
    %v411 = vsub.f32 %v282, %v311
    %v412 = vsub.f32 %v283, %v318
    %v413 = vsub.f32 %v284, %v325
    %v414 = vsub.f32 %v285, %v332
    %v415 = vsub.f32 %v286, %v339
    %v416 = vsub.f32 %v287, %v346
    %v417 = vsub.f32 %v288, %v353
    %v418 = vsub.f32 %v289, %v360
    %v419 = vsub.f32 %v290, %v367
    %v420 = vsub.f32 %v291, %v374
    %v421 = vsub.f32 %v292, %v381
    %v422 = vsub.f32 %v293, %v388
    %v423 = vsub.f32 %v294, %v395
    %v424 = vsub.f32 %v295, %v402
    %v425 = vsub.f32 %v296, %v409
    %v426 = vmul.f32 %v410, 1.442695
    %v427 = vpow.pop %v426
    %v428 = vmul.f32 %v411, 1.442695
    %v429 = vpow.pop %v428
    %v430 = vmul.f32 %v412, 1.442695
    %v431 = vpow.pop %v430
    %v432 = vmul.f32 %v413, 1.442695
    %v433 = vpow.pop %v432
    %v434 = vmul.f32 %v414, 1.442695
    %v435 = vpow.pop %v434
    %v436 = vmul.f32 %v415, 1.442695
    %v437 = vpow.pop %v436
    %v438 = vmul.f32 %v416, 1.442695
    %v439 = vpow.pop %v438
    %v440 = vmul.f32 %v417, 1.442695
    %v441 = vpow.pop %v440
    %v442 = vmul.f32 %v418, 1.442695
    %v443 = vpow.pop %v442
    %v444 = vmul.f32 %v419, 1.442695
    %v445 = vpow.pop %v444
    %v446 = vmul.f32 %v420, 1.442695
    %v447 = vpow.pop %v446
    %v448 = vmul.f32 %v421, 1.442695
    %v449 = vpow.pop %v448
    %v450 = vmul.f32 %v422, 1.442695
    %v451 = vpow.pop %v450
    %v452 = vmul.f32 %v423, 1.442695
    %v453 = vpow.pop %v452
    %v454 = vmul.f32 %v424, 1.442695
    %v455 = vpow.pop %v454
    %v456 = vmul.f32 %v425, 1.442695
    %v457 = vpow.pop %v456
    %v458 = vmul.f32 %v427, %v72
    %v459 = vmul.f32 %v429, %v73
    %v460 = vmul.f32 %v431, %v74
    %v461 = vmul.f32 %v433, %v75
    %v462 = vmul.f32 %v435, %v76
    %v463 = vmul.f32 %v437, %v77
    %v464 = vmul.f32 %v439, %v78
    %v465 = vmul.f32 %v441, %v79
    %v466 = vmul.f32 %v443, %v80
    %v467 = vmul.f32 %v445, %v81
    %v468 = vmul.f32 %v447, %v82
    %v469 = vmul.f32 %v449, %v83
    %v470 = vmul.f32 %v451, %v84
    %v471 = vmul.f32 %v453, %v85
    %v472 = vmul.f32 %v455, %v86
    %v473 = vmul.f32 %v457, %v87
    %v474 = vsel %vm297, %v458, 0.0
    %v475 = vrot.slane %v474, 4
    %v476 = vadd.f32 %v474, %v475
    %v477 = vrot.slane %v476, 2
    %v478 = vadd.f32 %v476, %v477
    %v479 = vrot.slane %v478, 1
    %v480 = vadd.f32 %v478, %v479
    %v481 = vsel %vm297, %v459, 0.0
    %v482 = vrot.slane %v481, 4
    %v483 = vadd.f32 %v481, %v482
    %v484 = vrot.slane %v483, 2
    %v485 = vadd.f32 %v483, %v484
    %v486 = vrot.slane %v485, 1
    %v487 = vadd.f32 %v485, %v486
    %v488 = vsel %vm297, %v460, 0.0
    %v489 = vrot.slane %v488, 4
    %v490 = vadd.f32 %v488, %v489
    %v491 = vrot.slane %v490, 2
    %v492 = vadd.f32 %v490, %v491
    %v493 = vrot.slane %v492, 1
    %v494 = vadd.f32 %v492, %v493
    %v495 = vsel %vm297, %v461, 0.0
    %v496 = vrot.slane %v495, 4
    %v497 = vadd.f32 %v495, %v496
    %v498 = vrot.slane %v497, 2
    %v499 = vadd.f32 %v497, %v498
    %v500 = vrot.slane %v499, 1
    %v501 = vadd.f32 %v499, %v500
    %v502 = vsel %vm297, %v462, 0.0
    %v503 = vrot.slane %v502, 4
    %v504 = vadd.f32 %v502, %v503
    %v505 = vrot.slane %v504, 2
    %v506 = vadd.f32 %v504, %v505
    %v507 = vrot.slane %v506, 1
    %v508 = vadd.f32 %v506, %v507
    %v509 = vsel %vm297, %v463, 0.0
    %v510 = vrot.slane %v509, 4
    %v511 = vadd.f32 %v509, %v510
    %v512 = vrot.slane %v511, 2
    %v513 = vadd.f32 %v511, %v512
    %v514 = vrot.slane %v513, 1
    %v515 = vadd.f32 %v513, %v514
    %v516 = vsel %vm297, %v464, 0.0
    %v517 = vrot.slane %v516, 4
    %v518 = vadd.f32 %v516, %v517
    %v519 = vrot.slane %v518, 2
    %v520 = vadd.f32 %v518, %v519
    %v521 = vrot.slane %v520, 1
    %v522 = vadd.f32 %v520, %v521
    %v523 = vsel %vm297, %v465, 0.0
    %v524 = vrot.slane %v523, 4
    %v525 = vadd.f32 %v523, %v524
    %v526 = vrot.slane %v525, 2
    %v527 = vadd.f32 %v525, %v526
    %v528 = vrot.slane %v527, 1
    %v529 = vadd.f32 %v527, %v528
    %v530 = vsel %vm297, %v466, 0.0
    %v531 = vrot.slane %v530, 4
    %v532 = vadd.f32 %v530, %v531
    %v533 = vrot.slane %v532, 2
    %v534 = vadd.f32 %v532, %v533
    %v535 = vrot.slane %v534, 1
    %v536 = vadd.f32 %v534, %v535
    %v537 = vsel %vm297, %v467, 0.0
    %v538 = vrot.slane %v537, 4
    %v539 = vadd.f32 %v537, %v538
    %v540 = vrot.slane %v539, 2
    %v541 = vadd.f32 %v539, %v540
    %v542 = vrot.slane %v541, 1
    %v543 = vadd.f32 %v541, %v542
    %v544 = vsel %vm297, %v468, 0.0
    %v545 = vrot.slane %v544, 4
    %v546 = vadd.f32 %v544, %v545
    %v547 = vrot.slane %v546, 2
    %v548 = vadd.f32 %v546, %v547
    %v549 = vrot.slane %v548, 1
    %v550 = vadd.f32 %v548, %v549
    %v551 = vsel %vm297, %v469, 0.0
    %v552 = vrot.slane %v551, 4
    %v553 = vadd.f32 %v551, %v552
    %v554 = vrot.slane %v553, 2
    %v555 = vadd.f32 %v553, %v554
    %v556 = vrot.slane %v555, 1
    %v557 = vadd.f32 %v555, %v556
    %v558 = vsel %vm297, %v470, 0.0
    %v559 = vrot.slane %v558, 4
    %v560 = vadd.f32 %v558, %v559
    %v561 = vrot.slane %v560, 2
    %v562 = vadd.f32 %v560, %v561
    %v563 = vrot.slane %v562, 1
    %v564 = vadd.f32 %v562, %v563
    %v565 = vsel %vm297, %v471, 0.0
    %v566 = vrot.slane %v565, 4
    %v567 = vadd.f32 %v565, %v566
    %v568 = vrot.slane %v567, 2
    %v569 = vadd.f32 %v567, %v568
    %v570 = vrot.slane %v569, 1
    %v571 = vadd.f32 %v569, %v570
    %v572 = vsel %vm297, %v472, 0.0
    %v573 = vrot.slane %v572, 4
    %v574 = vadd.f32 %v572, %v573
    %v575 = vrot.slane %v574, 2
    %v576 = vadd.f32 %v574, %v575
    %v577 = vrot.slane %v576, 1
    %v578 = vadd.f32 %v576, %v577
    %v579 = vsel %vm297, %v473, 0.0
    %v580 = vrot.slane %v579, 4
    %v581 = vadd.f32 %v579, %v580
    %v582 = vrot.slane %v581, 2
    %v583 = vadd.f32 %v581, %v582
    %v584 = vrot.slane %v583, 1
    %v585 = vadd.f32 %v583, %v584
    %v586 = vadd.f32 %v480, 1e-13
    %v587 = vadd.f32 %v487, 1e-13
    %v588 = vadd.f32 %v494, 1e-13
    %v589 = vadd.f32 %v501, 1e-13
    %v590 = vadd.f32 %v508, 1e-13
    %v591 = vadd.f32 %v515, 1e-13
    %v592 = vadd.f32 %v522, 1e-13
    %v593 = vadd.f32 %v529, 1e-13
    %v594 = vadd.f32 %v536, 1e-13
    %v595 = vadd.f32 %v543, 1e-13
    %v596 = vadd.f32 %v550, 1e-13
    %v597 = vadd.f32 %v557, 1e-13
    %v598 = vadd.f32 %v564, 1e-13
    %v599 = vadd.f32 %v571, 1e-13
    %v600 = vadd.f32 %v578, 1e-13
    %v601 = vadd.f32 %v585, 1e-13
    %v602 = vrcp.pop %v586
    %v603 = vrcp.pop %v587
    %v604 = vrcp.pop %v588
    %v605 = vrcp.pop %v589
    %v606 = vrcp.pop %v590
    %v607 = vrcp.pop %v591
    %v608 = vrcp.pop %v592
    %v609 = vrcp.pop %v593
    %v610 = vrcp.pop %v594
    %v611 = vrcp.pop %v595
    %v612 = vrcp.pop %v596
    %v613 = vrcp.pop %v597
    %v614 = vrcp.pop %v598
    %v615 = vrcp.pop %v599
    %v616 = vrcp.pop %v600
    %v617 = vrcp.pop %v601
    %v618 = vmul.f32 %v586, %v602
    %v619 = vmul.f32 %v587, %v603
    %v620 = vmul.f32 %v588, %v604
    %v621 = vmul.f32 %v589, %v605
    %v622 = vmul.f32 %v590, %v606
    %v623 = vmul.f32 %v591, %v607
    %v624 = vmul.f32 %v592, %v608
    %v625 = vmul.f32 %v593, %v609
    %v626 = vmul.f32 %v594, %v610
    %v627 = vmul.f32 %v595, %v611
    %v628 = vmul.f32 %v596, %v612
    %v629 = vmul.f32 %v597, %v613
    %v630 = vmul.f32 %v598, %v614
    %v631 = vmul.f32 %v599, %v615
    %v632 = vmul.f32 %v600, %v616
    %v633 = vmul.f32 %v601, %v617
    %v634 = vsub.f32 2.0, %v618
    %v635 = vsub.f32 2.0, %v619
    %v636 = vsub.f32 2.0, %v620
    %v637 = vsub.f32 2.0, %v621
    %v638 = vsub.f32 2.0, %v622
    %v639 = vsub.f32 2.0, %v623
    %v640 = vsub.f32 2.0, %v624
    %v641 = vsub.f32 2.0, %v625
    %v642 = vsub.f32 2.0, %v626
    %v643 = vsub.f32 2.0, %v627
    %v644 = vsub.f32 2.0, %v628
    %v645 = vsub.f32 2.0, %v629
    %v646 = vsub.f32 2.0, %v630
    %v647 = vsub.f32 2.0, %v631
    %v648 = vsub.f32 2.0, %v632
    %v649 = vsub.f32 2.0, %v633
    %v650 = vmul.f32 %v602, %v634
    %v651 = vmul.f32 %v603, %v635
    %v652 = vmul.f32 %v604, %v636
    %v653 = vmul.f32 %v605, %v637
    %v654 = vmul.f32 %v606, %v638
    %v655 = vmul.f32 %v607, %v639
    %v656 = vmul.f32 %v608, %v640
    %v657 = vmul.f32 %v609, %v641
    %v658 = vmul.f32 %v610, %v642
    %v659 = vmul.f32 %v611, %v643
    %v660 = vmul.f32 %v612, %v644
    %v661 = vmul.f32 %v613, %v645
    %v662 = vmul.f32 %v614, %v646
    %v663 = vmul.f32 %v615, %v647
    %v664 = vmul.f32 %v616, %v648
    %v665 = vmul.f32 %v617, %v649
    %v666 = vmul.f32 %v458, %v650
    %v667 = vmul.f32 %v459, %v651
    %v668 = vmul.f32 %v460, %v652
    %v669 = vmul.f32 %v461, %v653
    %v670 = vmul.f32 %v462, %v654
    %v671 = vmul.f32 %v463, %v655
    %v672 = vmul.f32 %v464, %v656
    %v673 = vmul.f32 %v465, %v657
    %v674 = vmul.f32 %v466, %v658
    %v675 = vmul.f32 %v467, %v659
    %v676 = vmul.f32 %v468, %v660
    %v677 = vmul.f32 %v469, %v661
    %v678 = vmul.f32 %v470, %v662
    %v679 = vmul.f32 %v471, %v663
    %v680 = vmul.f32 %v472, %v664
    %v681 = vmul.f32 %v473, %v665
    %683 = vset.pattern.permute.xlu0 0
    %684 = vperm.xlu0 %683, %v666
    %v685 = vpop.permute.xlu0 %684
    %688 = vset.pattern.permute.xlu0 0
    %689 = vperm.xlu0 %688, %v667
    %v690 = vpop.permute.xlu0 %689
    %693 = vset.pattern.permute.xlu0 0
    %694 = vperm.xlu0 %693, %v668
    %v695 = vpop.permute.xlu0 %694
    %698 = vset.pattern.permute.xlu0 0
    %699 = vperm.xlu0 %698, %v669
    %v700 = vpop.permute.xlu0 %699
    %703 = vset.pattern.permute.xlu0 0
    %704 = vperm.xlu0 %703, %v670
    %v705 = vpop.permute.xlu0 %704
    %708 = vset.pattern.permute.xlu0 0
    %709 = vperm.xlu0 %708, %v671
    %v710 = vpop.permute.xlu0 %709
    %713 = vset.pattern.permute.xlu0 0
    %714 = vperm.xlu0 %713, %v672
    %v715 = vpop.permute.xlu0 %714
    %718 = vset.pattern.permute.xlu0 0
    %719 = vperm.xlu0 %718, %v673
    %v720 = vpop.permute.xlu0 %719
    %723 = vset.pattern.permute.xlu0 0
    %724 = vperm.xlu0 %723, %v674
    %v725 = vpop.permute.xlu0 %724
    %728 = vset.pattern.permute.xlu0 0
    %729 = vperm.xlu0 %728, %v675
    %v730 = vpop.permute.xlu0 %729
    %733 = vset.pattern.permute.xlu0 0
    %734 = vperm.xlu0 %733, %v676
    %v735 = vpop.permute.xlu0 %734
    %738 = vset.pattern.permute.xlu0 0
    %739 = vperm.xlu0 %738, %v677
    %v740 = vpop.permute.xlu0 %739
    %743 = vset.pattern.permute.xlu0 0
    %744 = vperm.xlu0 %743, %v678
    %v745 = vpop.permute.xlu0 %744
    %748 = vset.pattern.permute.xlu0 0
    %749 = vperm.xlu0 %748, %v679
    %v750 = vpop.permute.xlu0 %749
    %753 = vset.pattern.permute.xlu0 0
    %754 = vperm.xlu0 %753, %v680
    %v755 = vpop.permute.xlu0 %754
    %758 = vset.pattern.permute.xlu0 0
    %759 = vperm.xlu0 %758, %v681
    %v760 = vpop.permute.xlu0 %759
    %v762 = vmul.f32 %v685, %v170
    %v763 = vmul.f32 %v690, %v171
    %v764 = vmul.f32 %v695, %v172
    %v765 = vmul.f32 %v700, %v173
    %v766 = vmul.f32 %v705, %v174
    %v767 = vmul.f32 %v710, %v175
    %v768 = vmul.f32 %v715, %v176
    %v769 = vmul.f32 %v720, %v177
    %v770 = vmul.f32 %v725, %v178
    %v771 = vmul.f32 %v730, %v179
    %v772 = vmul.f32 %v735, %v180
    %v773 = vmul.f32 %v740, %v181
    %v774 = vmul.f32 %v745, %v182
    %v775 = vmul.f32 %v750, %v183
    %v776 = vmul.f32 %v755, %v184
    %v777 = vmul.f32 %v760, %v185
    %v778 = vsel %vm209, %v762, 0.0
    %v779 = vrot.slane %v778, 4
    %v780 = vadd.f32 %v778, %v779
    %v781 = vrot.slane %v780, 2
    %v782 = vadd.f32 %v780, %v781
    %v783 = vrot.slane %v782, 1
    %v784 = vadd.f32 %v782, %v783
    %v785 = vsel %vm209, %v763, 0.0
    %v786 = vrot.slane %v785, 4
    %v787 = vadd.f32 %v785, %v786
    %v788 = vrot.slane %v787, 2
    %v789 = vadd.f32 %v787, %v788
    %v790 = vrot.slane %v789, 1
    %v791 = vadd.f32 %v789, %v790
    %v792 = vsel %vm209, %v764, 0.0
    %v793 = vrot.slane %v792, 4
    %v794 = vadd.f32 %v792, %v793
    %v795 = vrot.slane %v794, 2
    %v796 = vadd.f32 %v794, %v795
    %v797 = vrot.slane %v796, 1
    %v798 = vadd.f32 %v796, %v797
    %v799 = vsel %vm209, %v765, 0.0
    %v800 = vrot.slane %v799, 4
    %v801 = vadd.f32 %v799, %v800
    %v802 = vrot.slane %v801, 2
    %v803 = vadd.f32 %v801, %v802
    %v804 = vrot.slane %v803, 1
    %v805 = vadd.f32 %v803, %v804
    %v806 = vsel %vm209, %v766, 0.0
    %v807 = vrot.slane %v806, 4
    %v808 = vadd.f32 %v806, %v807
    %v809 = vrot.slane %v808, 2
    %v810 = vadd.f32 %v808, %v809
    %v811 = vrot.slane %v810, 1
    %v812 = vadd.f32 %v810, %v811
    %v813 = vsel %vm209, %v767, 0.0
    %v814 = vrot.slane %v813, 4
    %v815 = vadd.f32 %v813, %v814
    %v816 = vrot.slane %v815, 2
    %v817 = vadd.f32 %v815, %v816
    %v818 = vrot.slane %v817, 1
    %v819 = vadd.f32 %v817, %v818
    %v820 = vsel %vm209, %v768, 0.0
    %v821 = vrot.slane %v820, 4
    %v822 = vadd.f32 %v820, %v821
    %v823 = vrot.slane %v822, 2
    %v824 = vadd.f32 %v822, %v823
    %v825 = vrot.slane %v824, 1
    %v826 = vadd.f32 %v824, %v825
    %v827 = vsel %vm209, %v769, 0.0
    %v828 = vrot.slane %v827, 4
    %v829 = vadd.f32 %v827, %v828
    %v830 = vrot.slane %v829, 2
    %v831 = vadd.f32 %v829, %v830
    %v832 = vrot.slane %v831, 1
    %v833 = vadd.f32 %v831, %v832
    %v834 = vsel %vm209, %v770, 0.0
    %v835 = vrot.slane %v834, 4
    %v836 = vadd.f32 %v834, %v835
    %v837 = vrot.slane %v836, 2
    %v838 = vadd.f32 %v836, %v837
    %v839 = vrot.slane %v838, 1
    %v840 = vadd.f32 %v838, %v839
    %v841 = vsel %vm209, %v771, 0.0
    %v842 = vrot.slane %v841, 4
    %v843 = vadd.f32 %v841, %v842
    %v844 = vrot.slane %v843, 2
    %v845 = vadd.f32 %v843, %v844
    %v846 = vrot.slane %v845, 1
    %v847 = vadd.f32 %v845, %v846
    %v848 = vsel %vm209, %v772, 0.0
    %v849 = vrot.slane %v848, 4
    %v850 = vadd.f32 %v848, %v849
    %v851 = vrot.slane %v850, 2
    %v852 = vadd.f32 %v850, %v851
    %v853 = vrot.slane %v852, 1
    %v854 = vadd.f32 %v852, %v853
    %v855 = vsel %vm209, %v773, 0.0
    %v856 = vrot.slane %v855, 4
    %v857 = vadd.f32 %v855, %v856
    %v858 = vrot.slane %v857, 2
    %v859 = vadd.f32 %v857, %v858
    %v860 = vrot.slane %v859, 1
    %v861 = vadd.f32 %v859, %v860
    %v862 = vsel %vm209, %v774, 0.0
    %v863 = vrot.slane %v862, 4
    %v864 = vadd.f32 %v862, %v863
    %v865 = vrot.slane %v864, 2
    %v866 = vadd.f32 %v864, %v865
    %v867 = vrot.slane %v866, 1
    %v868 = vadd.f32 %v866, %v867
    %v869 = vsel %vm209, %v775, 0.0
    %v870 = vrot.slane %v869, 4
    %v871 = vadd.f32 %v869, %v870
    %v872 = vrot.slane %v871, 2
    %v873 = vadd.f32 %v871, %v872
    %v874 = vrot.slane %v873, 1
    %v875 = vadd.f32 %v873, %v874
    %v876 = vsel %vm209, %v776, 0.0
    %v877 = vrot.slane %v876, 4
    %v878 = vadd.f32 %v876, %v877
    %v879 = vrot.slane %v878, 2
    %v880 = vadd.f32 %v878, %v879
    %v881 = vrot.slane %v880, 1
    %v882 = vadd.f32 %v880, %v881
    %v883 = vsel %vm209, %v777, 0.0
    %v884 = vrot.slane %v883, 4
    %v885 = vadd.f32 %v883, %v884
    %v886 = vrot.slane %v885, 2
    %v887 = vadd.f32 %v885, %v886
    %v888 = vrot.slane %v887, 1
    %v889 = vadd.f32 %v887, %v888
    %v890 = vsel %vm297, %v666, 0.0
    %v891 = vrot.slane %v890, 4
    %v892 = vadd.f32 %v890, %v891
    %v893 = vrot.slane %v892, 2
    %v894 = vadd.f32 %v892, %v893
    %v895 = vrot.slane %v894, 1
    %v896 = vadd.f32 %v894, %v895
    %v897 = vsel %vm297, %v667, 0.0
    %v898 = vrot.slane %v897, 4
    %v899 = vadd.f32 %v897, %v898
    %v900 = vrot.slane %v899, 2
    %v901 = vadd.f32 %v899, %v900
    %v902 = vrot.slane %v901, 1
    %v903 = vadd.f32 %v901, %v902
    %v904 = vsel %vm297, %v668, 0.0
    %v905 = vrot.slane %v904, 4
    %v906 = vadd.f32 %v904, %v905
    %v907 = vrot.slane %v906, 2
    %v908 = vadd.f32 %v906, %v907
    %v909 = vrot.slane %v908, 1
    %v910 = vadd.f32 %v908, %v909
    %v911 = vsel %vm297, %v669, 0.0
    %v912 = vrot.slane %v911, 4
    %v913 = vadd.f32 %v911, %v912
    %v914 = vrot.slane %v913, 2
    %v915 = vadd.f32 %v913, %v914
    %v916 = vrot.slane %v915, 1
    %v917 = vadd.f32 %v915, %v916
    %v918 = vsel %vm297, %v670, 0.0
    %v919 = vrot.slane %v918, 4
    %v920 = vadd.f32 %v918, %v919
    %v921 = vrot.slane %v920, 2
    %v922 = vadd.f32 %v920, %v921
    %v923 = vrot.slane %v922, 1
    %v924 = vadd.f32 %v922, %v923
    %v925 = vsel %vm297, %v671, 0.0
    %v926 = vrot.slane %v925, 4
    %v927 = vadd.f32 %v925, %v926
    %v928 = vrot.slane %v927, 2
    %v929 = vadd.f32 %v927, %v928
    %v930 = vrot.slane %v929, 1
    %v931 = vadd.f32 %v929, %v930
    %v932 = vsel %vm297, %v672, 0.0
    %v933 = vrot.slane %v932, 4
    %v934 = vadd.f32 %v932, %v933
    %v935 = vrot.slane %v934, 2
    %v936 = vadd.f32 %v934, %v935
    %v937 = vrot.slane %v936, 1
    %v938 = vadd.f32 %v936, %v937
    %v939 = vsel %vm297, %v673, 0.0
    %v940 = vrot.slane %v939, 4
    %v941 = vadd.f32 %v939, %v940
    %v942 = vrot.slane %v941, 2
    %v943 = vadd.f32 %v941, %v942
    %v944 = vrot.slane %v943, 1
    %v945 = vadd.f32 %v943, %v944
    %v946 = vsel %vm297, %v674, 0.0
    %v947 = vrot.slane %v946, 4
    %v948 = vadd.f32 %v946, %v947
    %v949 = vrot.slane %v948, 2
    %v950 = vadd.f32 %v948, %v949
    %v951 = vrot.slane %v950, 1
    %v952 = vadd.f32 %v950, %v951
    %v953 = vsel %vm297, %v675, 0.0
    %v954 = vrot.slane %v953, 4
    %v955 = vadd.f32 %v953, %v954
    %v956 = vrot.slane %v955, 2
    %v957 = vadd.f32 %v955, %v956
    %v958 = vrot.slane %v957, 1
    %v959 = vadd.f32 %v957, %v958
    %v960 = vsel %vm297, %v676, 0.0
    %v961 = vrot.slane %v960, 4
    %v962 = vadd.f32 %v960, %v961
    %v963 = vrot.slane %v962, 2
    %v964 = vadd.f32 %v962, %v963
    %v965 = vrot.slane %v964, 1
    %v966 = vadd.f32 %v964, %v965
    %v967 = vsel %vm297, %v677, 0.0
    %v968 = vrot.slane %v967, 4
    %v969 = vadd.f32 %v967, %v968
    %v970 = vrot.slane %v969, 2
    %v971 = vadd.f32 %v969, %v970
    %v972 = vrot.slane %v971, 1
    %v973 = vadd.f32 %v971, %v972
    %v974 = vsel %vm297, %v678, 0.0
    %v975 = vrot.slane %v974, 4
    %v976 = vadd.f32 %v974, %v975
    %v977 = vrot.slane %v976, 2
    %v978 = vadd.f32 %v976, %v977
    %v979 = vrot.slane %v978, 1
    %v980 = vadd.f32 %v978, %v979
    %v981 = vsel %vm297, %v679, 0.0
    %v982 = vrot.slane %v981, 4
    %v983 = vadd.f32 %v981, %v982
    %v984 = vrot.slane %v983, 2
    %v985 = vadd.f32 %v983, %v984
    %v986 = vrot.slane %v985, 1
    %v987 = vadd.f32 %v985, %v986
    %v988 = vsel %vm297, %v680, 0.0
    %v989 = vrot.slane %v988, 4
    %v990 = vadd.f32 %v988, %v989
    %v991 = vrot.slane %v990, 2
    %v992 = vadd.f32 %v990, %v991
    %v993 = vrot.slane %v992, 1
    %v994 = vadd.f32 %v992, %v993
    %v995 = vsel %vm297, %v681, 0.0
    %v996 = vrot.slane %v995, 4
    %v997 = vadd.f32 %v995, %v996
    %v998 = vrot.slane %v997, 2
    %v999 = vadd.f32 %v997, %v998
    %v1000 = vrot.slane %v999, 1
    %v1001 = vadd.f32 %v999, %v1000
    %v1002 = vpack.c.bf16 %v784, %v784
    %v1003 = vpack.c.bf16 %v791, %v791
    %v1004 = vpack.c.bf16 %v798, %v798
    %v1005 = vpack.c.bf16 %v805, %v805
    %v1006 = vpack.c.bf16 %v812, %v812
    %v1007 = vpack.c.bf16 %v819, %v819
    %v1008 = vpack.c.bf16 %v826, %v826
    %v1009 = vpack.c.bf16 %v833, %v833
    %v1010 = vpack.c.bf16 %v840, %v840
    %v1011 = vpack.c.bf16 %v847, %v847
    %v1012 = vpack.c.bf16 %v854, %v854
    %v1013 = vpack.c.bf16 %v861, %v861
    %v1014 = vpack.c.bf16 %v868, %v868
    %v1015 = vpack.c.bf16 %v875, %v875
    %v1016 = vpack.c.bf16 %v882, %v882
    %v1017 = vpack.c.bf16 %v889, %v889
    %v1018 = vld [vmem:[%s3] sm:$0xf]
    %v1019 = vld [vmem:[%s3 + $0x4] sm:$0xf]
    %v1020 = vld [vmem:[%s3 + $0x8] sm:$0xf]
    %v1021 = vld [vmem:[%s3 + $0xc] sm:$0xf]
    %v1022 = vld [vmem:[%s3 + $0x10] sm:$0xf]
    %v1023 = vld [vmem:[%s3 + $0x14] sm:$0xf]
    %v1024 = vld [vmem:[%s3 + $0x18] sm:$0x1]
    %v1025 = vld [vmem:[%s4] sm:$0x1]
    %1027 = vset.pattern.permute.xlu0 0
    %1028 = vperm.xlu0 %1027, %v896
    %v1029 = vpop.permute.xlu0 %1028
    %1032 = vset.pattern.permute.xlu0 0
    %1033 = vperm.xlu0 %1032, %v903
    %v1034 = vpop.permute.xlu0 %1033
    %1037 = vset.pattern.permute.xlu0 0
    %1038 = vperm.xlu0 %1037, %v910
    %v1039 = vpop.permute.xlu0 %1038
    %1042 = vset.pattern.permute.xlu0 0
    %1043 = vperm.xlu0 %1042, %v917
    %v1044 = vpop.permute.xlu0 %1043
    %1047 = vset.pattern.permute.xlu0 0
    %1048 = vperm.xlu0 %1047, %v924
    %v1049 = vpop.permute.xlu0 %1048
    %1052 = vset.pattern.permute.xlu0 0
    %1053 = vperm.xlu0 %1052, %v931
    %v1054 = vpop.permute.xlu0 %1053
    %1057 = vset.pattern.permute.xlu0 0
    %1058 = vperm.xlu0 %1057, %v938
    %v1059 = vpop.permute.xlu0 %1058
    %1062 = vset.pattern.permute.xlu0 0
    %1063 = vperm.xlu0 %1062, %v945
    %v1064 = vpop.permute.xlu0 %1063
    %1067 = vset.pattern.permute.xlu0 0
    %1068 = vperm.xlu0 %1067, %v952
    %v1069 = vpop.permute.xlu0 %1068
    %1072 = vset.pattern.permute.xlu0 0
    %1073 = vperm.xlu0 %1072, %v959
    %v1074 = vpop.permute.xlu0 %1073
    %1077 = vset.pattern.permute.xlu0 0
    %1078 = vperm.xlu0 %1077, %v966
    %v1079 = vpop.permute.xlu0 %1078
    %1082 = vset.pattern.permute.xlu0 0
    %1083 = vperm.xlu0 %1082, %v973
    %v1084 = vpop.permute.xlu0 %1083
    %1087 = vset.pattern.permute.xlu0 0
    %1088 = vperm.xlu0 %1087, %v980
    %v1089 = vpop.permute.xlu0 %1088
    %1092 = vset.pattern.permute.xlu0 0
    %1093 = vperm.xlu0 %1092, %v987
    %v1094 = vpop.permute.xlu0 %1093
    %1097 = vset.pattern.permute.xlu0 0
    %1098 = vperm.xlu0 %1097, %v994
    %v1099 = vpop.permute.xlu0 %1098
    %1102 = vset.pattern.permute.xlu0 0
    %1103 = vperm.xlu0 %1102, %v1001
    %v1104 = vpop.permute.xlu0 %1103
    %v1107 = vlaneseq
    %v1108 = vshrl.u32 %v1107, 7
    %v1109 = vsub.s32 0, %v1108
    %v1110 = vrot.slane %v1025, %v1109
    %v1112 = vmul.f32 %v1029, %v1110
    %v1113 = vmul.f32 %v1034, %v1110
    %v1114 = vmul.f32 %v1039, %v1110
    %v1115 = vmul.f32 %v1044, %v1110
    %v1116 = vmul.f32 %v1049, %v1110
    %v1117 = vmul.f32 %v1054, %v1110
    %v1118 = vmul.f32 %v1059, %v1110
    %v1119 = vmul.f32 %v1064, %v1110
    %v1120 = vmul.f32 %v1069, %v1110
    %v1121 = vmul.f32 %v1074, %v1110
    %v1122 = vmul.f32 %v1079, %v1110
    %v1123 = vmul.f32 %v1084, %v1110
    %v1124 = vmul.f32 %v1089, %v1110
    %v1125 = vmul.f32 %v1094, %v1110
    %v1126 = vmul.f32 %v1099, %v1110
    %v1127 = vmul.f32 %v1104, %v1110
    %v1144 = vunpack.c.l.b16 %v1002
    %v1145 = vunpack.c.l.b16 %v1003
    %v1146 = vunpack.c.l.b16 %v1004
    %v1147 = vunpack.c.l.b16 %v1005
    %v1148 = vunpack.c.l.b16 %v1006
    %v1149 = vunpack.c.l.b16 %v1007
    %v1150 = vunpack.c.l.b16 %v1008
    %v1151 = vunpack.c.l.b16 %v1009
    %v1152 = vunpack.c.l.b16 %v1010
    %v1153 = vunpack.c.l.b16 %v1011
    %v1154 = vunpack.c.l.b16 %v1012
    %v1155 = vunpack.c.l.b16 %v1013
    %v1156 = vunpack.c.l.b16 %v1014
    %v1157 = vunpack.c.l.b16 %v1015
    %v1158 = vunpack.c.l.b16 %v1016
    %v1159 = vunpack.c.l.b16 %v1017
    %vm1160 = vcmask 1041409
    %v1161 = vsel %vm1160, %v1145, %v1144
    %vm1162 = vcmask 1042434
    %v1163 = vsel %vm1162, %v1146, %v1161
    %vm1164 = vcmask 1043459
    %v1165 = vsel %vm1164, %v1147, %v1163
    %vm1166 = vcmask 1044484
    %v1167 = vsel %vm1166, %v1148, %v1165
    %vm1168 = vcmask 1045509
    %v1169 = vsel %vm1168, %v1149, %v1167
    %vm1170 = vcmask 1046534
    %v1171 = vsel %vm1170, %v1150, %v1169
    %vm1172 = vcmask 1047559
    %v1173 = vsel %vm1172, %v1151, %v1171
    %v1174 = vsel %vm1160, %v1153, %v1152
    %v1175 = vsel %vm1162, %v1154, %v1174
    %v1176 = vsel %vm1164, %v1155, %v1175
    %v1177 = vsel %vm1166, %v1156, %v1176
    %v1178 = vsel %vm1168, %v1157, %v1177
    %v1179 = vsel %vm1170, %v1158, %v1178
    %v1180 = vsel %vm1172, %v1159, %v1179
    %v1181 = vpack.c.b16 %v1180, %v1173
    %v1189 = vunpack.c.l.b16 %v1018
    %v1190 = vunpack.c.l.b16 %v1019
    %v1191 = vunpack.c.l.b16 %v1020
    %v1192 = vunpack.c.l.b16 %v1021
    %v1193 = vunpack.c.l.b16 %v1022
    %v1194 = vunpack.c.l.b16 %v1023
    %v1195 = vunpack.c.l.b16 %v1024
    %v1196 = vpack.c.b16 %v1190, %v1189
    %v1197 = vpack.c.b16 %v1192, %v1191
    %v1198 = vpack.c.b16 %v1194, %v1193
    %v1199 = vpack.c.b16 %v1195, %v1195
    %v1219 = vrot.slane %v1113, 7
    %v1220 = vsel %vm1160, %v1219, %v1112
    %v1221 = vrot.slane %v1114, 6
    %v1222 = vsel %vm1162, %v1221, %v1220
    %v1223 = vrot.slane %v1115, 5
    %v1224 = vsel %vm1164, %v1223, %v1222
    %v1225 = vrot.slane %v1116, 4
    %v1226 = vsel %vm1166, %v1225, %v1224
    %v1227 = vrot.slane %v1117, 3
    %v1228 = vsel %vm1168, %v1227, %v1226
    %v1229 = vrot.slane %v1118, 2
    %v1230 = vsel %vm1170, %v1229, %v1228
    %v1231 = vrot.slane %v1119, 1
    %v1232 = vsel %vm1172, %v1231, %v1230
    %v1233 = vrot.slane %v1121, 7
    %v1234 = vsel %vm1160, %v1233, %v1120
    %v1235 = vrot.slane %v1122, 6
    %v1236 = vsel %vm1162, %v1235, %v1234
    %v1237 = vrot.slane %v1123, 5
    %v1238 = vsel %vm1164, %v1237, %v1236
    %v1239 = vrot.slane %v1124, 4
    %v1240 = vsel %vm1166, %v1239, %v1238
    %v1241 = vrot.slane %v1125, 3
    %v1242 = vsel %vm1168, %v1241, %v1240
    %v1243 = vrot.slane %v1126, 2
    %v1244 = vsel %vm1170, %v1243, %v1242
    %v1245 = vrot.slane %v1127, 1
    %v1246 = vsel %vm1172, %v1245, %v1244
    %v1250 = vsel %vm209, %v1181, 0
    %vm1252 = vcmask 1040384
    %v1254 = vsel %vm1252, %v1199, 0
    %1256 = vmatprep.subr.bf16.mxu0 0
    %1257 = vmatpush1.bf16.msra.mxu0 0
    %1258 = vmatprep.subr.bf16.mxu0 0
    %1259 = vmatpush1.bf16.msra.mxu0 0
    %1260 = vmatprep.subr.bf16.mxu0 0
    %1261 = vmatpush1.bf16.msra.mxu0 0
    %1262 = vmatprep.subr.bf16.mxu0 0
    %1263 = vmatpush1.bf16.msra.mxu0 0
    %1264 = vmatprep.subr.bf16.mxu0 0
    %1265 = vmatpush1.bf16.msra.mxu0 %v1254
    %1266 = vmatprep.subr.bf16.mxu0 0
    %1267 = vmatpush1.bf16.msra.mxu0 %v1198
    %1268 = vmatprep.subr.bf16.mxu0 0
    %1269 = vmatpush1.bf16.msra.mxu0 %v1197
    %1270 = vmatprep.subr.bf16.mxu0 0
    %1271 = vmatpush1.bf16.msra.mxu0 %v1196
    %1272 = vmatprep.subr.bf16.mxu0 0
    %1273 = vmatpush2.bf16.msra.mxu0 0
    %1274 = vmatprep.subr.bf16.mxu0 0
    %1275 = vmatpush2.bf16.msra.mxu0 0
    %1276 = vmatprep.subr.bf16.mxu0 0
    %1277 = vmatpush2.bf16.msra.mxu0 0
    %1278 = vmatprep.subr.bf16.mxu0 0
    %1279 = vmatpush2.bf16.msra.mxu0 0
    %1280 = vmatprep.subr.bf16.mxu0 0
    %1281 = vmatpush2.bf16.msra.mxu0 0
    %1282 = vmatprep.subr.bf16.mxu0 0
    %1283 = vmatpush2.bf16.msra.mxu0 0
    %1284 = vmatprep.subr.bf16.mxu0 0
    %1285 = vmatpush2.bf16.msra.mxu0 0
    %1286 = vmatprep.subr.bf16.mxu0 0
    %1287 = vmatpush2.bf16.msra.mxu0 0
    %1288 = vmatprep.mubr.bf16.mxu0 0
    %1289 = vmatmul.mubr.bf16.gmra.mxu0 %v1250
    %v1290 = vpop.f32.mrf.mxu0
    %v1291 = vadd.f32 %v1232, %v1290
    %v1292 = vpop.f32.mrf.mxu0
    %v1293 = vpop.f32.mrf.mxu0
    %v1294 = vadd.f32 %v1246, %v1293
    %v1295 = vpop.f32.mrf.mxu0
    %1296 = vdwg.mxu0
    %vm1297 = vcmask 130048
    %1298 = vst.msk [vmem:[#allocation3] sm:$0xff] %vm1297, %v1291
    %1299 = vst.msk [vmem:[#allocation3 + $0x8] sm:$0xff] %vm1297, %v1294
    // Predicated region
    $region22: #{span_representation.1} parent=1 // pred_check
      _
    $region23: #{span_representation.1} parent=1 // pred_check_branch
      %1301 = sbr.rel (0) target = $region25
    $region24: #{span_representation.1} parent=1 // pred_region
      %s1303 = ssub.s32 256, 256
      %1304 = vsyncadd [#allocation4], %s1303
      %s1305 = sshll.u32 [#allocation3], 4
      %s1306 = int_to_ptr.vmem [resolvable:$true] %s1305
      %1311 = dma.vmem_to_hbm [thread:$0]  %s1306, 256, %s5, [#allocation4], 128, 128, 8
    $region25: #{span_representation.1} parent=1 // pred_fallthru
      _
    // Predicated region
    $region26: #{span_representation.1} parent=1 // pred_check
      _
    $region27: #{span_representation.1} parent=1 // pred_check_branch
      %1313 = sbr.rel (0) target = $region29
    $region28: #{span_representation.1} parent=1 // pred_region
      %1314 = dma.done [#allocation4], 256
    $region29: #{span_representation.1} parent=1 // pred_fallthru
      _
    %1315 = vsyncpa [#allocation4], 1

</llo_original>
